<compile_context>
chip_gen: v7x
topology: tpu7x:2x2x1
jax: 0.10.0
libtpu: 0.0.40
codegen_flags: <defaults>
</compile_context>

<pallas_src>
import functools

import jax
import jax.numpy as jnp
from jax.experimental import pallas as pl
from jax.experimental.pallas import tpu as pltpu


def _round_up(x, m):
    return ((x + m - 1) // m) * m


def _gauss_loss_kernel(inv_ref, cg_ref, s1_ref, s2_ref, cgt_ref, cc_ref, out_ref, *,
                       epsilon, n_gt, n_centers, n_clusters, n_points, tn, tncl,
                       mask_rows, mask_cols):
    # inv_ref: (1, 1) SMEM      1 / (2*sigma^2)
    # cg_ref:  (tn, 3) VMEM     gt centers (shifted, row-padded)   -- i on sublanes
    # s1_ref:  (3, tncl) VMEM   sum_p clusters (shifted, padded)   -- j on lanes
    # s2_ref:  (3, tncl) VMEM   sum_p clusters^2
    # cgt_ref: (N, 3) VMEM      full gt centers (center loss, tile (0,0) only)
    # cc_ref:  (N, 3) VMEM      full cluster_centers
    # out_ref: (8, tncl) VMEM   per-tile partial sums (already loss-scaled)
    i = pl.program_id(0)
    j = pl.program_id(1)
    inv_s2 = inv_ref[0, 0]
    npts = jnp.float32(n_points)

    cg = cg_ref[...]                                     # [tn, 3]
    s1 = s1_ref[...]                                     # [3, tncl]
    s2 = s2_ref[...]                                     # [3, tncl]

    # ---- point loss: sqd = S2 - 2*c*S1 + P*c^2 (exact collapse of sum_p) ----
    acc = jnp.zeros((tn, tncl), jnp.float32)
    for k in range(3):                                   # unrolled (k = x, y, z)
        c_col = cg[:, k:k + 1]                           # [tn, 1]   (i on sublanes)
        s1r = s1[k:k + 1, :]                             # [1, tncl] (j on lanes)
        s2r = s2[k:k + 1, :]
        sqd = (s2r - 2.0 * c_col * s1r) + npts * (c_col * c_col)   # [tn, tncl]
        acc = acc + jnp.log(jnp.exp(-sqd * inv_s2) + epsilon)

    if mask_rows:                                        # zero padded gt rows
        rid = i * tn + jax.lax.broadcasted_iota(jnp.int32, (tn, tncl), 0)
        acc = jnp.where(rid < n_gt, acc, 0.0)

    # sublane fold [tn, tncl] -> [8, tncl]: static tile-aligned slices, pure VPU
    part = acc[0:8, :]
    for m in range(1, tn // 8):
        part = part + acc[m * 8:(m + 1) * 8, :]

    if mask_cols:                                        # zero padded cluster cols
        cid = j * tncl + jax.lax.broadcasted_iota(jnp.int32, (8, tncl), 1)
        part = jnp.where(cid < n_clusters, part, 0.0)

    part = part * jnp.float32(-0.5 / (n_clusters * n_points))

    first = jnp.logical_and(i == 0, j == 0)

    @pl.when(first)
    def _with_center_loss():
        # one-time O(N) center loss, folded into element (0, 0) of this block
        d0 = cc_ref[:, 0:1] - cgt_ref[:, 0:1]
        d1 = cc_ref[:, 1:2] - cgt_ref[:, 1:2]
        d2 = cc_ref[:, 2:3] - cgt_ref[:, 2:3]
        csd = d0 * d0 + d1 * d1 + d2 * d2                # [N, 1]
        csum = jnp.sum(jnp.log(jnp.exp(-csd * inv_s2) + epsilon))
        cterm = csum * jnp.float32(-0.5 / n_centers)
        r0 = jax.lax.broadcasted_iota(jnp.int32, (8, tncl), 0) == 0
        c0 = jax.lax.broadcasted_iota(jnp.int32, (8, tncl), 1) == 0
        out_ref[...] = part + jnp.where(jnp.logical_and(r0, c0), cterm, 0.0)

    @pl.when(jnp.logical_not(first))
    def _point_only():
        out_ref[...] = part


def _vmem_limit_bytes(tn, tncl, n):
    lane = 128
    est = (2 * tn * lane * 4                 # cg block (3 lanes pad to 128), 2x buffered
           + 4 * 8 * tncl * 4                # s1/s2 blocks (3->8 sublanes), 2x buffered
           + 4 * _round_up(n, 8) * lane * 4  # full c_gt / cluster_centers
           + 2 * 8 * tncl * 4                # output blocks
           + 8 * tn * tncl * 4               # elementwise temporaries
           + (4 << 20))                      # headroom for compiler internals
    cap = 64 * 1024 * 1024                   # conservative fallback (v7x physical VMEM)
    try:
        cap = int(getattr(pltpu.get_tpu_info(), "vmem_capacity_bytes", cap))
    except Exception:
        pass
    return int(min(max(est, 16 * 1024 * 1024), int(cap * 0.7)))


def gaussian_kernel_loss(gt_bbox, cluster_centers, clusters, alpha=1.0, epsilon=1e-8,
                         gt_tile=256, cluster_tile=512):
    """Pallas TPU GaussionKernelLoss forward.

    gt_bbox: [N, >=6], cluster_centers: [N, 3], clusters: [Ncl, P, 3].
    """
    gt_bbox = jnp.asarray(gt_bbox, jnp.float32)
    cluster_centers = jnp.asarray(cluster_centers, jnp.float32)
    clusters = jnp.asarray(clusters, jnp.float32)

    n = gt_bbox.shape[0]
    n_centers = cluster_centers.shape[0]
    n_clusters, n_points = clusters.shape[0], clusters.shape[1]
    if n_centers != n:
        raise ValueError("cluster_centers.shape[0] must equal gt_bbox.shape[0] "
                         f"(got {n_centers} vs {n}), as in the PyTorch reference.")

    c_gt = gt_bbox[:, 0:3]
    dims = gt_bbox[:, 3:6]
    sigma = jnp.mean(dims) * jnp.float32(alpha)
    inv_s2 = (1.0 / (2.0 * sigma * sigma)).reshape(1, 1).astype(jnp.float32)

    # Shift all coordinates by the gt centroid: exact no-op for the loss, but it
    # keeps S2 - 2cS1 + Pc^2 well-conditioned in f32. The shift fuses into the
    # XLA reduction below, so `clusters` is read exactly once and never
    # transposed / rewritten in HBM.
    offset = jnp.mean(c_gt, axis=0, keepdims=True)        # [1, 3]
    cg_sh = c_gt - offset                                 # [N, 3]
    cc_sh = cluster_centers - offset                      # [N, 3]
    cl_sh = clusters - offset                             # [Ncl, P, 3] (fused)
    s1_t = jnp.transpose(jnp.sum(cl_sh, axis=1))          # [3, Ncl]  (tiny transpose)
    s2_t = jnp.transpose(jnp.sum(cl_sh * cl_sh, axis=1))  # [3, Ncl]

    # --- tiling: gt rows on sublanes, clusters on lanes ---
    gi = -(-n // int(gt_tile))
    tn = _round_up(-(-n // gi), 8)
    n_pad = tn * gi
    gj = -(-n_clusters // int(cluster_tile))
    tncl = _round_up(-(-n_clusters // gj), 128)
    ncl_pad = tncl * gj

    cg_p = cg_sh if n_pad == n else jnp.pad(cg_sh, ((0, n_pad - n), (0, 0)))
    if ncl_pad != n_clusters:
        s1_t = jnp.pad(s1_t, ((0, 0), (0, ncl_pad - n_clusters)))
        s2_t = jnp.pad(s2_t, ((0, 0), (0, ncl_pad - n_clusters)))

    kernel = functools.partial(
        _gauss_loss_kernel, epsilon=float(epsilon), n_gt=int(n),
        n_centers=int(n_centers), n_clusters=int(n_clusters),
        n_points=int(n_points), tn=int(tn), tncl=int(tncl),
        mask_rows=bool(n_pad != n), mask_cols=bool(ncl_pad != n_clusters))

    partials = pl.pallas_call(
        kernel,
        out_shape=jax.ShapeDtypeStruct((gi * 8, ncl_pad), jnp.float32),
        grid_spec=pltpu.PrefetchScalarGridSpec(
            num_scalar_prefetch=0,
            grid=(gi, gj),
            in_specs=[
                pl.BlockSpec(memory_space=pltpu.MemorySpace.SMEM),  # 1/(2*sigma^2)
                pl.BlockSpec((tn, 3), lambda i, j: (i, 0)),         # gt centers (tile)
                pl.BlockSpec((3, tncl), lambda i, j: (0, j)),       # S1^T
                pl.BlockSpec((3, tncl), lambda i, j: (0, j)),       # S2^T
                pl.BlockSpec((n, 3), lambda i, j: (0, 0)),          # gt centers (full)
                pl.BlockSpec((n, 3), lambda i, j: (0, 0)),          # cluster_centers
            ],
            out_specs=pl.BlockSpec((8, tncl), lambda i, j: (i, j)),
        ),
        compiler_params=pltpu.CompilerParams(
            dimension_semantics=("parallel", "parallel"),
            vmem_limit_bytes=_vmem_limit_bytes(tn, tncl, n),
        ),
    )(inv_s2, cg_p, s1_t, s2_t, cg_sh, cc_sh)

    # Tiny final reduce of the (already loss-scaled) per-tile partial sums.
    return jnp.sum(partials)


def _reference_jax(gt_bbox, cluster_centers, clusters, alpha=1.0, epsilon=1e-8):
    # direct transcription of the PyTorch forward (same broadcasting as torch)
    c_gt = gt_bbox[:, :3]
    bbox_dims = gt_bbox[:, 3:6]
    sigma = jnp.mean(bbox_dims) * alpha
    sigma_squared = 2.0 * sigma ** 2
    center_distances = cluster_centers - c_gt
    center_sq = jnp.sum(center_distances ** 2, axis=1)
    center_sim = jnp.exp(-center_sq / sigma_squared)
    center_loss = -jnp.sum(jnp.log(center_sim + epsilon)) / cluster_centers.shape[0]
    distances = clusters - c_gt[:, None, None, :]        # [N, Ncl, P, 3]
    sq = jnp.sum(distances ** 2, axis=2)                 # [N, Ncl, 3]
    sim = jnp.exp(-sq / sigma_squared)
    point_loss = -jnp.sum(jnp.log(sim + epsilon)) / (clusters.shape[0] * clusters.shape[1])
    return 0.5 * center_loss + 0.5 * point_loss


if __name__ == "__main__":
    N, P = 8, 16
    key = jax.random.PRNGKey(0)
    k1, k2, k3 = jax.random.split(key, 3)

    gt_bbox = jax.random.normal(k1, (N, 7), dtype=jnp.float32)
    # box dims (cols 3:6) positive, as real boxes would be
    gt_bbox = gt_bbox.at[:, 3:6].set(jnp.abs(gt_bbox[:, 3:6]) + 0.5)
    cluster_centers = jax.random.normal(k2, (N, 3), dtype=jnp.float32)
    clusters = jax.random.normal(k3, (N, P, 3), dtype=jnp.float32)

    loss = gaussian_kernel_loss(gt_bbox, cluster_centers, clusters)
    loss = jax.block_until_ready(loss)

    ref = _reference_jax(gt_bbox, cluster_centers, clusters)
    assert jnp.allclose(loss, ref, rtol=1e-3, atol=1e-3), (loss, ref)
    print("KERNEL_OK")
</pallas_src>

<mosaic_0001>
module attributes {stable_mosaic.version = 11 : i64} {
  func.func @_gauss_loss_kernel(%arg0: i32, %arg1: i32, %arg2: memref<1x1xf32, #tpu.memory_space<smem>>, %arg3: memref<8x3xf32, #tpu.memory_space<vmem>>, %arg4: memref<3x128xf32, #tpu.memory_space<vmem>>, %arg5: memref<3x128xf32, #tpu.memory_space<vmem>>, %arg6: memref<8x3xf32, #tpu.memory_space<vmem>>, %arg7: memref<8x3xf32, #tpu.memory_space<vmem>>, %arg8: memref<8x128xf32, #tpu.memory_space<vmem>>) attributes {dimension_semantics = [#tpu.dimension_semantics<parallel>, #tpu.dimension_semantics<parallel>], iteration_bounds = array<i64: 1, 1>, scalar_prefetch = 0 : i64, scratch_operands = 0 : i64, tpu.core_type = #tpu.core_type<tc>, window_params = [{transform_indices = @transform_0, window_bounds = array<i64: 1, 1>}, {transform_indices = @transform_1, window_bounds = array<i64: 8, 3>}, {transform_indices = @transform_2, window_bounds = array<i64: 3, 128>}, {transform_indices = @transform_3, window_bounds = array<i64: 3, 128>}, {pipeline_mode = #tpu.pipeline_mode<synchronous>, transform_indices = @transform_4, window_bounds = array<i64: 8, 3>}, {pipeline_mode = #tpu.pipeline_mode<synchronous>, transform_indices = @transform_5, window_bounds = array<i64: 8, 3>}, {transform_indices = @transform_6, window_bounds = array<i64: 8, 128>}]} {
    %c0 = arith.constant 0 : index
    %c0_0 = arith.constant 0 : index
    %0 = memref.load %arg2[%c0, %c0_0] : memref<1x1xf32, #tpu.memory_space<smem>>
    %c0_1 = arith.constant 0 : index
    %c0_2 = arith.constant 0 : index
    %1 = vector.load %arg3[%c0_1, %c0_2] : memref<8x3xf32, #tpu.memory_space<vmem>>, vector<8x3xf32>
    %c0_3 = arith.constant 0 : index
    %c0_4 = arith.constant 0 : index
    %2 = vector.load %arg4[%c0_3, %c0_4] : memref<3x128xf32, #tpu.memory_space<vmem>>, vector<3x128xf32>
    %c0_5 = arith.constant 0 : index
    %c0_6 = arith.constant 0 : index
    %3 = vector.load %arg5[%c0_5, %c0_6] : memref<3x128xf32, #tpu.memory_space<vmem>>, vector<3x128xf32>
    %cst = arith.constant 0.000000e+00 : f32
    %4 = vector.broadcast %cst : f32 to vector<8x128xf32>
    %5 = vector.extract_strided_slice %1 {offsets = [0, 0], sizes = [8, 1], strides = [1, 1]} : vector<8x3xf32> to vector<8x1xf32>
    %6 = vector.extract_strided_slice %2 {offsets = [0, 0], sizes = [1, 128], strides = [1, 1]} : vector<3x128xf32> to vector<1x128xf32>
    %7 = vector.extract_strided_slice %3 {offsets = [0, 0], sizes = [1, 128], strides = [1, 1]} : vector<3x128xf32> to vector<1x128xf32>
    %cst_7 = arith.constant 2.000000e+00 : f32
    %8 = vector.broadcast %cst_7 : f32 to vector<8x1xf32>
    %9 = arith.mulf %8, %5 : vector<8x1xf32>
    %10 = vector.broadcast %9 : vector<8x1xf32> to vector<8x128xf32>
    %11 = vector.broadcast %6 : vector<1x128xf32> to vector<8x128xf32>
    %12 = arith.mulf %10, %11 : vector<8x128xf32>
    %13 = vector.broadcast %7 : vector<1x128xf32> to vector<8x128xf32>
    %14 = arith.subf %13, %12 : vector<8x128xf32>
    %15 = arith.mulf %5, %5 : vector<8x1xf32>
    %cst_8 = arith.constant 1.600000e+01 : f32
    %16 = vector.broadcast %cst_8 : f32 to vector<8x1xf32>
    %17 = arith.mulf %16, %15 : vector<8x1xf32>
    %18 = vector.broadcast %17 : vector<8x1xf32> to vector<8x128xf32>
    %19 = arith.addf %14, %18 : vector<8x128xf32>
    %cst_9 = arith.constant 0.000000e+00 : f32
    %20 = vector.broadcast %cst_9 : f32 to vector<8x128xf32>
    %21 = arith.subf %20, %19 : vector<8x128xf32>
    %22 = vector.broadcast %0 : f32 to vector<8x128xf32>
    %23 = arith.mulf %21, %22 : vector<8x128xf32>
    %24 = math.exp %23 : vector<8x128xf32>
    %cst_10 = arith.constant 9.99999993E-9 : f32
    %25 = vector.broadcast %cst_10 : f32 to vector<8x128xf32>
    %26 = arith.addf %24, %25 : vector<8x128xf32>
    %27 = math.log %26 : vector<8x128xf32>
    %28 = arith.addf %4, %27 : vector<8x128xf32>
    %29 = vector.extract_strided_slice %1 {offsets = [0, 1], sizes = [8, 1], strides = [1, 1]} : vector<8x3xf32> to vector<8x1xf32>
    %30 = vector.extract_strided_slice %2 {offsets = [1, 0], sizes = [1, 128], strides = [1, 1]} : vector<3x128xf32> to vector<1x128xf32>
    %31 = vector.extract_strided_slice %3 {offsets = [1, 0], sizes = [1, 128], strides = [1, 1]} : vector<3x128xf32> to vector<1x128xf32>
    %cst_11 = arith.constant 2.000000e+00 : f32
    %32 = vector.broadcast %cst_11 : f32 to vector<8x1xf32>
    %33 = arith.mulf %32, %29 : vector<8x1xf32>
    %34 = vector.broadcast %33 : vector<8x1xf32> to vector<8x128xf32>
    %35 = vector.broadcast %30 : vector<1x128xf32> to vector<8x128xf32>
    %36 = arith.mulf %34, %35 : vector<8x128xf32>
    %37 = vector.broadcast %31 : vector<1x128xf32> to vector<8x128xf32>
    %38 = arith.subf %37, %36 : vector<8x128xf32>
    %39 = arith.mulf %29, %29 : vector<8x1xf32>
    %cst_12 = arith.constant 1.600000e+01 : f32
    %40 = vector.broadcast %cst_12 : f32 to vector<8x1xf32>
    %41 = arith.mulf %40, %39 : vector<8x1xf32>
    %42 = vector.broadcast %41 : vector<8x1xf32> to vector<8x128xf32>
    %43 = arith.addf %38, %42 : vector<8x128xf32>
    %cst_13 = arith.constant 0.000000e+00 : f32
    %44 = vector.broadcast %cst_13 : f32 to vector<8x128xf32>
    %45 = arith.subf %44, %43 : vector<8x128xf32>
    %46 = vector.broadcast %0 : f32 to vector<8x128xf32>
    %47 = arith.mulf %45, %46 : vector<8x128xf32>
    %48 = math.exp %47 : vector<8x128xf32>
    %cst_14 = arith.constant 9.99999993E-9 : f32
    %49 = vector.broadcast %cst_14 : f32 to vector<8x128xf32>
    %50 = arith.addf %48, %49 : vector<8x128xf32>
    %51 = math.log %50 : vector<8x128xf32>
    %52 = arith.addf %28, %51 : vector<8x128xf32>
    %53 = vector.extract_strided_slice %1 {offsets = [0, 2], sizes = [8, 1], strides = [1, 1]} : vector<8x3xf32> to vector<8x1xf32>
    %54 = vector.extract_strided_slice %2 {offsets = [2, 0], sizes = [1, 128], strides = [1, 1]} : vector<3x128xf32> to vector<1x128xf32>
    %55 = vector.extract_strided_slice %3 {offsets = [2, 0], sizes = [1, 128], strides = [1, 1]} : vector<3x128xf32> to vector<1x128xf32>
    %cst_15 = arith.constant 2.000000e+00 : f32
    %56 = vector.broadcast %cst_15 : f32 to vector<8x1xf32>
    %57 = arith.mulf %56, %53 : vector<8x1xf32>
    %58 = vector.broadcast %57 : vector<8x1xf32> to vector<8x128xf32>
    %59 = vector.broadcast %54 : vector<1x128xf32> to vector<8x128xf32>
    %60 = arith.mulf %58, %59 : vector<8x128xf32>
    %61 = vector.broadcast %55 : vector<1x128xf32> to vector<8x128xf32>
    %62 = arith.subf %61, %60 : vector<8x128xf32>
    %63 = arith.mulf %53, %53 : vector<8x1xf32>
    %cst_16 = arith.constant 1.600000e+01 : f32
    %64 = vector.broadcast %cst_16 : f32 to vector<8x1xf32>
    %65 = arith.mulf %64, %63 : vector<8x1xf32>
    %66 = vector.broadcast %65 : vector<8x1xf32> to vector<8x128xf32>
    %67 = arith.addf %62, %66 : vector<8x128xf32>
    %cst_17 = arith.constant 0.000000e+00 : f32
    %68 = vector.broadcast %cst_17 : f32 to vector<8x128xf32>
    %69 = arith.subf %68, %67 : vector<8x128xf32>
    %70 = vector.broadcast %0 : f32 to vector<8x128xf32>
    %71 = arith.mulf %69, %70 : vector<8x128xf32>
    %72 = math.exp %71 : vector<8x128xf32>
    %cst_18 = arith.constant 9.99999993E-9 : f32
    %73 = vector.broadcast %cst_18 : f32 to vector<8x128xf32>
    %74 = arith.addf %72, %73 : vector<8x128xf32>
    %75 = math.log %74 : vector<8x128xf32>
    %76 = arith.addf %52, %75 : vector<8x128xf32>
    %c128_i32 = arith.constant 128 : i32
    %77 = arith.muli %arg1, %c128_i32 : i32
    %78 = tpu.iota {dimensions = array<i32: 1>} : vector<8x128xi32>
    %79 = vector.broadcast %77 : i32 to vector<8x128xi32>
    %80 = arith.addi %79, %78 : vector<8x128xi32>
    %c8_i32 = arith.constant 8 : i32
    %81 = vector.broadcast %c8_i32 : i32 to vector<8x128xi32>
    %82 = arith.cmpi slt, %80, %81 : vector<8x128xi32>
    %cst_19 = arith.constant 0.000000e+00 : f32
    %83 = vector.broadcast %cst_19 : f32 to vector<8x128xf32>
    %84 = arith.select %82, %76, %83 : vector<8x128xi1>, vector<8x128xf32>
    %cst_20 = arith.constant -3.906250e-03 : f32
    %85 = vector.broadcast %cst_20 : f32 to vector<8x128xf32>
    %86 = arith.mulf %84, %85 : vector<8x128xf32>
    %c0_i32 = arith.constant 0 : i32
    %87 = arith.cmpi eq, %arg0, %c0_i32 : i32
    %c0_i32_21 = arith.constant 0 : i32
    %88 = arith.cmpi eq, %arg1, %c0_i32_21 : i32
    %89 = arith.andi %87, %88 : i1
    %90 = arith.extui %89 : i1 to i32
    %c0_i32_22 = arith.constant 0 : i32
    %91 = arith.cmpi ne, %90, %c0_i32_22 : i32
    scf.if %91 {
      %c0_24 = arith.constant 0 : index
      %c0_25 = arith.constant 0 : index
      %95 = vector.load %arg7[%c0_24, %c0_25] : memref<8x3xf32, #tpu.memory_space<vmem>>, vector<8x1xf32>
      %c0_26 = arith.constant 0 : index
      %c0_27 = arith.constant 0 : index
      %96 = vector.load %arg6[%c0_26, %c0_27] : memref<8x3xf32, #tpu.memory_space<vmem>>, vector<8x1xf32>
      %97 = arith.subf %95, %96 : vector<8x1xf32>
      %c0_28 = arith.constant 0 : index
      %c1 = arith.constant 1 : index
      %98 = vector.load %arg7[%c0_28, %c1] : memref<8x3xf32, #tpu.memory_space<vmem>>, vector<8x1xf32>
      %c0_29 = arith.constant 0 : index
      %c1_30 = arith.constant 1 : index
      %99 = vector.load %arg6[%c0_29, %c1_30] : memref<8x3xf32, #tpu.memory_space<vmem>>, vector<8x1xf32>
      %100 = arith.subf %98, %99 : vector<8x1xf32>
      %c0_31 = arith.constant 0 : index
      %c2 = arith.constant 2 : index
      %101 = vector.load %arg7[%c0_31, %c2] : memref<8x3xf32, #tpu.memory_space<vmem>>, vector<8x1xf32>
      %c0_32 = arith.constant 0 : index
      %c2_33 = arith.constant 2 : index
      %102 = vector.load %arg6[%c0_32, %c2_33] : memref<8x3xf32, #tpu.memory_space<vmem>>, vector<8x1xf32>
      %103 = arith.subf %101, %102 : vector<8x1xf32>
      %104 = arith.mulf %97, %97 : vector<8x1xf32>
      %105 = arith.mulf %100, %100 : vector<8x1xf32>
      %106 = arith.addf %104, %105 : vector<8x1xf32>
      %107 = arith.mulf %103, %103 : vector<8x1xf32>
      %108 = arith.addf %106, %107 : vector<8x1xf32>
      %cst_34 = arith.constant 0.000000e+00 : f32
      %109 = vector.broadcast %cst_34 : f32 to vector<8x1xf32>
      %110 = arith.subf %109, %108 : vector<8x1xf32>
      %111 = vector.broadcast %0 : f32 to vector<8x1xf32>
      %112 = arith.mulf %110, %111 : vector<8x1xf32>
      %113 = math.exp %112 : vector<8x1xf32>
      %cst_35 = arith.constant 9.99999993E-9 : f32
      %114 = vector.broadcast %cst_35 : f32 to vector<8x1xf32>
      %115 = arith.addf %113, %114 : vector<8x1xf32>
      %116 = math.log %115 : vector<8x1xf32>
      %117 = vector.shape_cast %116 : vector<8x1xf32> to vector<1x8x1xf32>
      %cst_36 = arith.constant dense<0.000000e+00> : vector<1xf32>
      %118 = vector.multi_reduction <add>, %117, %cst_36 [1, 2] : vector<1x8x1xf32> to vector<1xf32>
      %119 = vector.shape_cast %118 : vector<1xf32> to vector<1x1x1xf32>
      %120 = vector.extract %119[0, 0, 0] : f32 from vector<1x1x1xf32>
      %cst_37 = arith.constant -6.250000e-02 : f32
      %121 = arith.mulf %120, %cst_37 : f32
      %122 = tpu.iota {dimensions = array<i32: 0>} : vector<8x128xi32>
      %c0_i32_38 = arith.constant 0 : i32
      %123 = vector.broadcast %c0_i32_38 : i32 to vector<8x128xi32>
      %124 = arith.cmpi eq, %122, %123 : vector<8x128xi32>
      %125 = tpu.iota {dimensions = array<i32: 1>} : vector<8x128xi32>
      %c0_i32_39 = arith.constant 0 : i32
      %126 = vector.broadcast %c0_i32_39 : i32 to vector<8x128xi32>
      %127 = arith.cmpi eq, %125, %126 : vector<8x128xi32>
      %128 = arith.andi %124, %127 : vector<8x128xi1>
      %cst_40 = arith.constant 0.000000e+00 : f32
      %129 = vector.broadcast %121 : f32 to vector<8x128xf32>
      %130 = vector.broadcast %cst_40 : f32 to vector<8x128xf32>
      %131 = arith.select %128, %129, %130 : vector<8x128xi1>, vector<8x128xf32>
      %132 = arith.addf %86, %131 : vector<8x128xf32>
      %c0_41 = arith.constant 0 : index
      %c0_42 = arith.constant 0 : index
      %133 = vector.load %arg8[%c0_41, %c0_42] : memref<8x128xf32, #tpu.memory_space<vmem>>, vector<8x128xf32>
      tpu.vector_store %arg8[%c0_41, %c0_42], %132 {strides = array<i32>} : memref<8x128xf32, #tpu.memory_space<vmem>>, vector<8x128xf32>,
    } else {
    }
    %true = arith.constant true
    %92 = arith.xori %89, %true : i1
    %93 = arith.extui %92 : i1 to i32
    %c0_i32_23 = arith.constant 0 : i32
    %94 = arith.cmpi ne, %93, %c0_i32_23 : i32
    scf.if %94 {
      %c0_24 = arith.constant 0 : index
      %c0_25 = arith.constant 0 : index
      %95 = vector.load %arg8[%c0_24, %c0_25] : memref<8x128xf32, #tpu.memory_space<vmem>>, vector<8x128xf32>
      tpu.vector_store %arg8[%c0_24, %c0_25], %86 {strides = array<i32>} : memref<8x128xf32, #tpu.memory_space<vmem>>, vector<8x128xf32>,
    } else {
    }
    return
  }
  func.func @transform_0(%arg0: i32, %arg1: i32) -> (i32, i32) {
    %c0_i32 = arith.constant 0 : i32
    %c0_i32_0 = arith.constant 0 : i32
    %c0_i32_1 = arith.constant 0 : i32
    return %c0_i32, %c0_i32_0 : i32, i32
  }
  func.func @transform_1(%arg0: i32, %arg1: i32) -> (i32, i32) {
    %c0_i32 = arith.constant 0 : i32
    %c0_i32_0 = arith.constant 0 : i32
    return %arg0, %c0_i32 : i32, i32
  }
  func.func @transform_2(%arg0: i32, %arg1: i32) -> (i32, i32) {
    %c0_i32 = arith.constant 0 : i32
    %c0_i32_0 = arith.constant 0 : i32
    return %c0_i32, %arg1 : i32, i32
  }
  func.func @transform_3(%arg0: i32, %arg1: i32) -> (i32, i32) {
    %c0_i32 = arith.constant 0 : i32
    %c0_i32_0 = arith.constant 0 : i32
    return %c0_i32, %arg1 : i32, i32
  }
  func.func @transform_4(%arg0: i32, %arg1: i32) -> (i32, i32) {
    %c0_i32 = arith.constant 0 : i32
    %c0_i32_0 = arith.constant 0 : i32
    %c0_i32_1 = arith.constant 0 : i32
    return %c0_i32, %c0_i32_0 : i32, i32
  }
  func.func @transform_5(%arg0: i32, %arg1: i32) -> (i32, i32) {
    %c0_i32 = arith.constant 0 : i32
    %c0_i32_0 = arith.constant 0 : i32
    %c0_i32_1 = arith.constant 0 : i32
    return %c0_i32, %c0_i32_0 : i32, i32
  }
  func.func @transform_6(%arg0: i32, %arg1: i32) -> (i32, i32) {
    %c0_i32 = arith.constant 0 : i32
    return %arg0, %arg1 : i32, i32
  }
}

</mosaic_0001>

<llo_original>
// kernel: tpu_custom_call.1
$region0: #{tpu_custom_call.1}
  #allocation0 [shape = 'u32[]', space=smem, size = 0x4, offset = 0x4, fixed_abs, tag = 'smem constant byte address 0x4 - core index']
  #allocation1 [shape = 'u32[144,128]{1,0:T(1,128)}', space=vmem, size = 0x12000, scoped, tag = 'internal scratch']
  #allocation2 [shape = 'f32[1,1]{1,0:T(1,128)S(6)}', space=smem, size = 0x200, scoped, tag = 'scoped memory for tpu_custom_call.1']
  %s0 = inlined_call_operand.<no memory space> [shape: f32[1,1], index: 0, kind: input, shape index: {}]
  %s1 = inlined_call_operand.vmem [shape: f32[8,3], index: 1, kind: input, shape index: {}]
  %s2 = inlined_call_operand.vmem [shape: f32[3,128], index: 2, kind: input, shape index: {}]
  %s3 = inlined_call_operand.vmem [shape: f32[3,128], index: 3, kind: input, shape index: {}]
  %s4 = inlined_call_operand.vmem [shape: f32[8,3], index: 4, kind: input, shape index: {}]
  %s5 = inlined_call_operand.vmem [shape: f32[8,3], index: 5, kind: input, shape index: {}]
  %s6 = inlined_call_operand.hbm [shape: f32[8,128], index: 6, kind: output, shape index: {}]
  %s7 = sld [smem:[#allocation0]]
  $region42: #{tpu_custom_call.1} parent=0
    _
  %s9 = ssub.s32 1, %s7
  %s10 = scalar_select 0, %s9, %s7
  %11 = sst [smem:[#allocation2]] %s0
  $region1: #{tpu_custom_call.1} parent=0
    #allocation3 [shape = 'u8[4096]{0}', space=vmem, size = 0x1000, scoped, tag = 'output window, operand 0, single buffered']
    #allocation4 [shape = 's32[1]{0}', space=sflag, size = 0x4, scoped, tag = 'scoped memory for tpu_custom_call.1']
    %12 = vsyncpa [#allocation4], 0
    // Predicated region
    $region2: #{tpu_custom_call.1} parent=1 // pred_check
      _
    $region3: #{tpu_custom_call.1} parent=1 // pred_check_branch
      %14 = sbr.rel (0) target = $region5
    $region4: #{tpu_custom_call.1} parent=1 // pred_region
      _
    $region5: #{tpu_custom_call.1} parent=1 // pred_fallthru
      _
    // Predicated region
    $region6: #{tpu_custom_call.1} parent=1 // pred_check
      _
    $region7: #{tpu_custom_call.1} parent=1 // pred_check_branch
      %16 = sbr.rel (0) target = $region9
    $region8: #{tpu_custom_call.1} parent=1 // pred_region
      _
    $region9: #{tpu_custom_call.1} parent=1 // pred_fallthru
      _
    // Predicated region
    $region10: #{tpu_custom_call.1} parent=1 // pred_check
      _
    $region11: #{tpu_custom_call.1} parent=1 // pred_check_branch
      %18 = sbr.rel (0) target = $region13
    $region12: #{tpu_custom_call.1} parent=1 // pred_region
      _
    $region13: #{tpu_custom_call.1} parent=1 // pred_fallthru
      _
    // Predicated region
    $region14: #{tpu_custom_call.1} parent=1 // pred_check
      _
    $region15: #{tpu_custom_call.1} parent=1 // pred_check_branch
      %20 = sbr.rel (0) target = $region17
    $region16: #{tpu_custom_call.1} parent=1 // pred_region
      _
    $region17: #{tpu_custom_call.1} parent=1 // pred_fallthru
      _
    // Predicated region
    $region18: #{tpu_custom_call.1} parent=1 // pred_check
      _
    $region19: #{tpu_custom_call.1} parent=1 // pred_check_branch
      %22 = sbr.rel (0) target = $region21
    $region20: #{tpu_custom_call.1} parent=1 // pred_region
      _
    $region21: #{tpu_custom_call.1} parent=1 // pred_fallthru
      _
    // Predicated region
    $region22: #{tpu_custom_call.1} parent=1 // pred_check
      _
    $region23: #{tpu_custom_call.1} parent=1 // pred_check_branch
      %24 = sbr.rel (0) target = $region25
    $region24: #{tpu_custom_call.1} parent=1 // pred_region
      _
    $region25: #{tpu_custom_call.1} parent=1 // pred_fallthru
      _
    %s25 = sld [smem:[#allocation2]]
    %v26 = vld [vmem:[%s1] sm:$0xff]
    %v27 = vld [vmem:[%s2] sm:$0x7]
    %v28 = vld [vmem:[%s3] sm:$0x7]
    %v29 = vmul.f32 %v26, 2.0
    %31 = vset.pattern.permute.xlu0 0
    %32 = vperm.xlu0 %31, %v29
    %v33 = vpop.permute.xlu0 %32
    %v35 = vlaneseq
    %v36 = vshrl.u32 %v35, 7
    %v37 = vsub.s32 0, %v36
    %v38 = vrot.slane %v27, %v37
    %v39 = vmul.f32 %v33, %v38
    %v40 = vlaneseq
    %v41 = vshrl.u32 %v40, 7
    %v42 = vsub.s32 0, %v41
    %v43 = vrot.slane %v28, %v42
    %v44 = vsub.f32 %v43, %v39
    %v45 = vmul.f32 %v26, %v26
    %v46 = vmul.f32 %v45, 16.0
    %48 = vset.pattern.permute.xlu0 0
    %49 = vperm.xlu0 %48, %v46
    %v50 = vpop.permute.xlu0 %49
    %v52 = vadd.f32 %v44, %v50
    %v53 = vsub.f32 0.0, %v52
    %v54 = vstv %s25
    %v55 = vmul.f32 %v53, %v54
    %v56 = vmul.f32 %v55, 1.442695
    %v57 = vpow.pop %v56
    %v58 = vadd.f32 %v57, 1e-08
    %v59 = vlog2.pop %v58
    %v60 = vmul.f32 %v59, 0.6931472
    %v61 = vadd.f32 %v60, 0.0
    %62 = vset.pattern.permute.xlu0 1
    %63 = vperm.xlu0 %62, %v29
    %v64 = vpop.permute.xlu0 %63
    %v66 = vlaneseq
    %v67 = vshrl.u32 %v66, 7
    %v68 = vsub.s32 1, %v67
    %v69 = vrot.slane %v27, %v68
    %v70 = vmul.f32 %v64, %v69
    %v71 = vlaneseq
    %v72 = vshrl.u32 %v71, 7
    %v73 = vsub.s32 1, %v72
    %v74 = vrot.slane %v28, %v73
    %v75 = vsub.f32 %v74, %v70
    %76 = vset.pattern.permute.xlu0 1
    %77 = vperm.xlu0 %76, %v46
    %v78 = vpop.permute.xlu0 %77
    %v80 = vadd.f32 %v75, %v78
    %v81 = vsub.f32 0.0, %v80
    %v82 = vmul.f32 %v81, %v54
    %v83 = vmul.f32 %v82, 1.442695
    %v84 = vpow.pop %v83
    %v85 = vadd.f32 %v84, 1e-08
    %v86 = vlog2.pop %v85
    %v87 = vmul.f32 %v86, 0.6931472
    %v88 = vadd.f32 %v61, %v87
    %89 = vset.pattern.permute.xlu0 2
    %90 = vperm.xlu0 %89, %v29
    %v91 = vpop.permute.xlu0 %90
    %v93 = vlaneseq
    %v94 = vshrl.u32 %v93, 7
    %v95 = vsub.s32 2, %v94
    %v96 = vrot.slane %v27, %v95
    %v97 = vmul.f32 %v91, %v96
    %v98 = vlaneseq
    %v99 = vshrl.u32 %v98, 7
    %v100 = vsub.s32 2, %v99
    %v101 = vrot.slane %v28, %v100
    %v102 = vsub.f32 %v101, %v97
    %103 = vset.pattern.permute.xlu0 2
    %104 = vperm.xlu0 %103, %v46
    %v105 = vpop.permute.xlu0 %104
    %v107 = vadd.f32 %v102, %v105
    %v108 = vsub.f32 0.0, %v107
    %v109 = vmul.f32 %v108, %v54
    %v110 = vmul.f32 %v109, 1.442695
    %v111 = vpow.pop %v110
    %v112 = vadd.f32 %v111, 1e-08
    %v113 = vlog2.pop %v112
    %v114 = vmul.f32 %v113, 0.6931472
    %v115 = vadd.f32 %v88, %v114
    %s116 = smul.u32 0, 128
    %v117 = vlaneseq
    %v118 = vand.u32 %v117, 127
    %v119 = vstv %s116
    %v120 = vadd.s32 %v119, %v118
    %vm121 = vcmp.lt.s32.totalorder %v120, 8
    %v122 = vsel %vm121, %v115, 0.0
    %v123 = vmul.f32 %v122, -0.00390625
    %p124 = scmp.eq.s32.totalorder 0, 0
    %p125 = scmp.eq.s32.totalorder 0, 0
    %p126 = pnand %p124, %p125
    %p127 = pneg %p126
    // Predicated region
    $region26: #{tpu_custom_call.1} parent=1 // pred_check
      _
    $region27: #{tpu_custom_call.1} parent=1 // pred_check_branch
      %129 = sbr.rel (%p126) target = $region29
    $region28: #{tpu_custom_call.1} parent=1 // pred_region
      %v130 = vld [vmem:[%s5] sm:$0xff]
      %v131 = vld [vmem:[%s4] sm:$0xff]
      %v132 = vsub.f32 %v130, %v131
      %v133 = vmul.f32 %v132, %v132
      %135 = vrot.lane.b32.xlu0 %v133, 127
      %v136 = vpop.permute.xlu0 %135
      %v138 = vadd.f32 %v133, %v136
      %139 = vrot.lane.b32.xlu0 %v133, 126
      %v140 = vpop.permute.xlu0 %139
      %v142 = vadd.f32 %v138, %v140
      %v143 = vsub.f32 0.0, %v142
      %v144 = vmul.f32 %v143, %v54
      %v145 = vmul.f32 %v144, 1.442695
      %v146 = vpow.pop %v145
      %v147 = vadd.f32 %v146, 1e-08
      %v148 = vlog2.pop %v147
      %v149 = vmul.f32 %v148, 0.6931472
      %vm150 = vcmask 7168
      %v151 = vsel %vm150, %v149, 0.0
      %152 = vadd.xlane.f32.xlu0 %v151
      %v153 = vpop.xlane.xlu0 %152
      %v154 = vrot.slane %v153, 4
      %v155 = vadd.f32 %v153, %v154
      %v156 = vrot.slane %v155, 2
      %v157 = vadd.f32 %v155, %v156
      %v158 = vrot.slane %v157, 1
      %v159 = vadd.f32 %v157, %v158
      %s160 = vtos %v159
      %s161 = smul.f32 %s160, -0.0625
      %v162 = vlaneseq
      %v163 = vshrl.u32 %v162, 7
      %vm164 = vcmp.eq.s32.totalorder %v163, 0
      %vm165 = vcmp.eq.s32.totalorder %v118, 0
      %vm166 = vmand %vm164, %vm165
      %v167 = vstv %s161
      %v168 = vsel %vm166, %v167, 0.0
      %v169 = vadd.f32 %v123, %v168
      %170 = vst [vmem:[#allocation3] sm:$0xff] %v169
    $region29: #{tpu_custom_call.1} parent=1 // pred_fallthru
      _
    %p171 = pneg %p127
    // Predicated region
    $region30: #{tpu_custom_call.1} parent=1 // pred_check
      _
    $region31: #{tpu_custom_call.1} parent=1 // pred_check_branch
      %173 = sbr.rel (%p127) target = $region33
    $region32: #{tpu_custom_call.1} parent=1 // pred_region
      %174 = vst [vmem:[#allocation3] sm:$0xff] %v123
    $region33: #{tpu_custom_call.1} parent=1 // pred_fallthru
      _
    // Predicated region
    $region34: #{tpu_custom_call.1} parent=1 // pred_check
      _
    $region35: #{tpu_custom_call.1} parent=1 // pred_check_branch
      %176 = sbr.rel (0) target = $region37
    $region36: #{tpu_custom_call.1} parent=1 // pred_region
      %s178 = ssub.s32 128, 128
      %179 = vsyncadd [#allocation4], %s178
      %s181 = sshll.u32 [#allocation3], 4
      %s182 = int_to_ptr.vmem [resolvable:$true] %s181
      %184 = dma.vmem_to_hbm [thread:$0]  %s182, 128, %s6, [#allocation4]
    $region37: #{tpu_custom_call.1} parent=1 // pred_fallthru
      _
    // Predicated region
    $region38: #{tpu_custom_call.1} parent=1 // pred_check
      _
    $region39: #{tpu_custom_call.1} parent=1 // pred_check_branch
      %186 = sbr.rel (0) target = $region41
    $region40: #{tpu_custom_call.1} parent=1 // pred_region
      %187 = dma.done [#allocation4], 128
    $region41: #{tpu_custom_call.1} parent=1 // pred_fallthru
      _
    %188 = vsyncpa [#allocation4], 1

</llo_original>
